<compile_context>
chip_gen: v6e
topology: v6e:2x2x1
jax: 0.10.0
libtpu: 0.0.40
codegen_flags: <defaults>
</compile_context>

<pallas_src>
import jax
import jax.numpy as jnp
from jax.experimental import pallas as pl
from jax.experimental.pallas import tpu as pltpu


def _round_up(v, m):
    return (v + m - 1) // m * m


def _cdiv(a, b):
    return (a + b - 1) // b


def _dec_kernel(x_ref, w1_ref, b1_ref, w2_ref, b2_ref, out_ref):
    # Layer 1: Linear(latent_dim -> latent_dim*10) + SiLU.
    # x arrives in its original dtype (f32); the MXU-feed cast (if weights are
    # bf16) happens here on the loaded tile, not as a wrapper-side HBM pass.
    x = x_ref[...]
    h = jnp.dot(x.astype(w1_ref.dtype), w1_ref[...],
                preferred_element_type=jnp.float32)
    h = h + b1_ref[...]                  # bias-add in f32 (VPU)
    h = h * jax.nn.sigmoid(h)            # SiLU in f32 (EUP sigmoid)
    # Layer 2: Linear(latent_dim*10 -> observation_dim), unpadded output cols.
    o = jnp.dot(h.astype(w2_ref.dtype), w2_ref[...],
                preferred_element_type=jnp.float32)
    o = o + b2_ref[...]
    out_ref[...] = o.astype(out_ref.dtype)


def prepare_dec_params(w1, b1, w2, b2, *, mxu_dtype=jnp.bfloat16):
    """One-time weight preparation (hoisted out of the forward pass).

    Matmul weights are stored in the MXU feed dtype (bf16 by default: native on
    v5e/v6e/v7x, ~3x fewer vmatmul passes than emulated f32 and half the
    VMEM-resident footprint). Biases are stored as f32 [1, N] rows so the
    kernel's bias-add / SiLU stay in f32. Pass mxu_dtype=None for full f32.
    """
    L, H = w1.shape
    _, O = w2.shape
    assert b1.shape == (H,) and b2.shape == (O,)
    wdt = jnp.float32 if mxu_dtype is None else mxu_dtype
    return (w1.astype(wdt),
            b1.reshape(1, H).astype(jnp.float32),
            w2.astype(wdt),
            b2.reshape(1, O).astype(jnp.float32))


def dec_forward(x, params, observation_noise_std, *, tm=2048, out_dtype=None):
    """Fused two-layer MLP head of Dec. Returns (mean, observation_noise_std).

    params:    output of prepare_dec_params (weights already in MXU dtype).
    tm:        requested batch tile (rows per grid step); rounded to a legal
               multiple of 16 and adapted to the batch size.
    out_dtype: dtype of the mean output (default: x.dtype). Use jnp.bfloat16 if
               the consumer tolerates it to halve output writeback.
    """
    w1, b1, w2, b2 = params
    B, L = x.shape
    H = w1.shape[1]
    O = w2.shape[1]
    assert w1.shape == (L, H) and w2.shape == (H, O)
    assert b1.shape == (1, H) and b2.shape == (1, O)

    out_dtype = x.dtype if out_dtype is None else out_dtype

    # Batch tile: multiple of 16 sublanes (legal for f32 and bf16 blocks), as
    # large as the batch allows (per-step overhead ~0.35us dominates at these
    # layer sizes), but capped so dual-TensorCore parts (v7x) get >= 2 tiles.
    ALIGN = 16
    TM = max(ALIGN, min(_round_up(tm, ALIGN), _round_up(B, ALIGN)))
    if _round_up(B, ALIGN) > ALIGN and _cdiv(B, TM) < 2:
        TM = _round_up(_cdiv(B, 2), ALIGN)
    B_pad = _round_up(B, TM)

    x_in = x
    if B_pad != B:  # pad only when needed (extra rows are garbage, sliced off)
        x_in = jnp.zeros((B_pad, L), x.dtype).at[:B].set(x)

    grid = (B_pad // TM,)

    cost = pl.CostEstimate(
        flops=2 * B_pad * (L * H + H * O),
        transcendentals=B_pad * H,                      # sigmoid per hidden unit
        bytes_accessed=(x_in.size * x_in.dtype.itemsize
                        + w1.size * w1.dtype.itemsize
                        + b1.size * b1.dtype.itemsize
                        + w2.size * w2.dtype.itemsize
                        + b2.size * b2.dtype.itemsize
                        + B_pad * O * jnp.dtype(out_dtype).itemsize),
    )

    mean = pl.pallas_call(
        _dec_kernel,
        out_shape=jax.ShapeDtypeStruct((B_pad, O), out_dtype),
        grid=grid,
        in_specs=[
            pl.BlockSpec((TM, L), lambda i: (i, 0)),    # streamed per batch tile
            pl.BlockSpec((L, H), lambda i: (0, 0)),     # VMEM-resident
            pl.BlockSpec((1, H), lambda i: (0, 0)),     # VMEM-resident
            pl.BlockSpec((H, O), lambda i: (0, 0)),     # VMEM-resident
            pl.BlockSpec((1, O), lambda i: (0, 0)),     # VMEM-resident
        ],
        out_specs=pl.BlockSpec((TM, O), lambda i: (i, 0)),
        compiler_params=pltpu.CompilerParams(
            dimension_semantics=("parallel",)),          # batch tiles independent
        cost_estimate=cost,
    )(x_in, w1, b1, w2, b2)

    if B_pad != B:
        mean = mean[:B]
    return mean, observation_noise_std


def init_dec_params(key, observation_dim, latent_dim,
                    observation_noise_std=None, dtype=jnp.float32):
    """Deterministic parameter init mirroring Dec.__init__ shapes.

    Weights are stored transposed vs. nn.Linear ([in, out]) so the kernel is a
    plain row-major matmul.
    """
    hidden = latent_dim * 10
    k1, k2, k3, k4 = jax.random.split(key, 4)
    lim1 = 1.0 / (latent_dim ** 0.5)
    lim2 = 1.0 / (hidden ** 0.5)
    w1 = jax.random.uniform(k1, (latent_dim, hidden), dtype, -lim1, lim1)
    b1 = jax.random.uniform(k2, (hidden,), dtype, -lim1, lim1)
    w2 = jax.random.uniform(k3, (hidden, observation_dim), dtype, -lim2, lim2)
    b2 = jax.random.uniform(k4, (observation_dim,), dtype, -lim2, lim2)

    if observation_noise_std is None or observation_noise_std is False:
        noise = jnp.full((observation_dim,), 0.05, dtype=jnp.float32)
    elif isinstance(observation_noise_std, float):
        noise = jnp.full((observation_dim,), observation_noise_std, dtype=jnp.float32)
    else:
        noise = jnp.asarray(observation_noise_std, dtype=jnp.float32)
        assert noise.shape == (observation_dim,)
    return w1, b1, w2, b2, noise


def _reference(x, w1, b1, w2, b2):
    h = x @ w1 + b1
    h = h * jax.nn.sigmoid(h)
    return h @ w2 + b2


if __name__ == "__main__":
    # Small shapes consistent with the module (hidden = latent_dim * 10).
    batch = 200              # not a multiple of the tile -> exercises padding
    latent_dim = 16          # hidden = 160
    observation_dim = 32     # kept unpadded (32 output lanes)

    key = jax.random.PRNGKey(0)
    kx, kp = jax.random.split(key)
    x = jax.random.normal(kx, (batch, latent_dim), dtype=jnp.float32)
    w1, b1, w2, b2, noise = init_dec_params(kp, observation_dim, latent_dim)

    ref = _reference(x, w1, b1, w2, b2)

    # f32-weight path with a small tile (multi-step grid) -> tight tolerance.
    params_f32 = prepare_dec_params(w1, b1, w2, b2, mxu_dtype=None)
    mean_f32, noise_out = dec_forward(x, params_f32, noise, tm=64)
    mean_f32 = jax.block_until_ready(mean_f32)
    noise_out = jax.block_until_ready(noise_out)
    assert mean_f32.shape == (batch, observation_dim)
    assert noise_out.shape == (observation_dim,)
    assert jnp.allclose(mean_f32, ref, atol=1e-5, rtol=1e-5)

    # Default bf16-weight MXU path, default (adaptive) tile -> loose tolerance.
    params_bf16 = prepare_dec_params(w1, b1, w2, b2)       # bf16 weights
    mean_bf16, _ = dec_forward(x, params_bf16, noise)      # default tm
    mean_bf16 = jax.block_until_ready(mean_bf16)
    assert mean_bf16.shape == (batch, observation_dim)
    assert jnp.allclose(mean_bf16, ref, atol=2e-2, rtol=2e-2)

    print("KERNEL_OK")
</pallas_src>

<mosaic_0001>
module attributes {stable_mosaic.version = 11 : i64} {
  func.func @_dec_kernel(%arg0: i32, %arg1: memref<64x16xf32, #tpu.memory_space<vmem>>, %arg2: memref<16x160xf32, #tpu.memory_space<vmem>>, %arg3: memref<1x160xf32, #tpu.memory_space<vmem>>, %arg4: memref<160x32xf32, #tpu.memory_space<vmem>>, %arg5: memref<1x32xf32, #tpu.memory_space<vmem>>, %arg6: memref<64x32xf32, #tpu.memory_space<vmem>>) attributes {dimension_semantics = [#tpu.dimension_semantics<parallel>], iteration_bounds = array<i64: 4>, scalar_prefetch = 0 : i64, scratch_operands = 0 : i64, tpu.core_type = #tpu.core_type<tc>, window_params = [{transform_indices = @transform_0, window_bounds = array<i64: 64, 16>}, {pipeline_mode = #tpu.pipeline_mode<synchronous>, transform_indices = @transform_1, window_bounds = array<i64: 16, 160>}, {pipeline_mode = #tpu.pipeline_mode<synchronous>, transform_indices = @transform_2, window_bounds = array<i64: 1, 160>}, {pipeline_mode = #tpu.pipeline_mode<synchronous>, transform_indices = @transform_3, window_bounds = array<i64: 160, 32>}, {pipeline_mode = #tpu.pipeline_mode<synchronous>, transform_indices = @transform_4, window_bounds = array<i64: 1, 32>}, {transform_indices = @transform_5, window_bounds = array<i64: 64, 32>}]} {
    %c0 = arith.constant 0 : index
    %c0_0 = arith.constant 0 : index
    %0 = vector.load %arg1[%c0, %c0_0] : memref<64x16xf32, #tpu.memory_space<vmem>>, vector<64x16xf32>
    %c0_1 = arith.constant 0 : index
    %c0_2 = arith.constant 0 : index
    %1 = vector.load %arg2[%c0_1, %c0_2] : memref<16x160xf32, #tpu.memory_space<vmem>>, vector<16x160xf32>
    %cst = arith.constant dense<0.000000e+00> : vector<64x160xf32>
    %2 = tpu.matmul %0, %1, %cst {dimension_numbers = #tpu.dot_dimension_numbers<[1], [0], [0], [1], [0, 0, 1, 1], [], []>} : vector<64x16xf32>, vector<16x160xf32>, vector<64x160xf32> -> vector<64x160xf32>
    %c0_3 = arith.constant 0 : index
    %c0_4 = arith.constant 0 : index
    %3 = vector.load %arg3[%c0_3, %c0_4] : memref<1x160xf32, #tpu.memory_space<vmem>>, vector<1x160xf32>
    %4 = vector.broadcast %3 : vector<1x160xf32> to vector<64x160xf32>
    %5 = arith.addf %2, %4 : vector<64x160xf32>
    %6 = arith.negf %5 : vector<64x160xf32>
    %7 = math.exp %6 : vector<64x160xf32>
    %cst_5 = arith.constant 1.000000e+00 : f32
    %8 = vector.broadcast %cst_5 : f32 to vector<64x160xf32>
    %9 = arith.addf %8, %7 : vector<64x160xf32>
    %10 = arith.divf %8, %9 : vector<64x160xf32>
    %11 = arith.mulf %5, %10 : vector<64x160xf32>
    %c0_6 = arith.constant 0 : index
    %c0_7 = arith.constant 0 : index
    %12 = vector.load %arg4[%c0_6, %c0_7] : memref<160x32xf32, #tpu.memory_space<vmem>>, vector<160x32xf32>
    %cst_8 = arith.constant dense<0.000000e+00> : vector<64x32xf32>
    %13 = tpu.matmul %11, %12, %cst_8 {dimension_numbers = #tpu.dot_dimension_numbers<[1], [0], [0], [1], [0, 0, 1, 1], [], []>} : vector<64x160xf32>, vector<160x32xf32>, vector<64x32xf32> -> vector<64x32xf32>
    %c0_9 = arith.constant 0 : index
    %c0_10 = arith.constant 0 : index
    %14 = vector.load %arg5[%c0_9, %c0_10] : memref<1x32xf32, #tpu.memory_space<vmem>>, vector<1x32xf32>
    %15 = vector.broadcast %14 : vector<1x32xf32> to vector<64x32xf32>
    %16 = arith.addf %13, %15 : vector<64x32xf32>
    %c0_11 = arith.constant 0 : index
    %c0_12 = arith.constant 0 : index
    %17 = vector.load %arg6[%c0_11, %c0_12] : memref<64x32xf32, #tpu.memory_space<vmem>>, vector<64x32xf32>
    tpu.vector_store %arg6[%c0_11, %c0_12], %16 {strides = array<i32>} : memref<64x32xf32, #tpu.memory_space<vmem>>, vector<64x32xf32>,
    return
  }
  func.func @transform_0(%arg0: i32) -> (i32, i32) {
    %c0_i32 = arith.constant 0 : i32
    %c0_i32_0 = arith.constant 0 : i32
    return %arg0, %c0_i32 : i32, i32
  }
  func.func @transform_1(%arg0: i32) -> (i32, i32) {
    %c0_i32 = arith.constant 0 : i32
    %c0_i32_0 = arith.constant 0 : i32
    %c0_i32_1 = arith.constant 0 : i32
    return %c0_i32, %c0_i32_0 : i32, i32
  }
  func.func @transform_2(%arg0: i32) -> (i32, i32) {
    %c0_i32 = arith.constant 0 : i32
    %c0_i32_0 = arith.constant 0 : i32
    %c0_i32_1 = arith.constant 0 : i32
    return %c0_i32, %c0_i32_0 : i32, i32
  }
  func.func @transform_3(%arg0: i32) -> (i32, i32) {
    %c0_i32 = arith.constant 0 : i32
    %c0_i32_0 = arith.constant 0 : i32
    %c0_i32_1 = arith.constant 0 : i32
    return %c0_i32, %c0_i32_0 : i32, i32
  }
  func.func @transform_4(%arg0: i32) -> (i32, i32) {
    %c0_i32 = arith.constant 0 : i32
    %c0_i32_0 = arith.constant 0 : i32
    %c0_i32_1 = arith.constant 0 : i32
    return %c0_i32, %c0_i32_0 : i32, i32
  }
  func.func @transform_5(%arg0: i32) -> (i32, i32) {
    %c0_i32 = arith.constant 0 : i32
    %c0_i32_0 = arith.constant 0 : i32
    return %arg0, %c0_i32 : i32, i32
  }
}

</mosaic_0001>

<llo_original>
// kernel: tpu_custom_call.1
$region0: #{tpu_custom_call.1}
  #allocation0 [shape = 'u32[]', space=smem, size = 0x4, offset = 0x4, fixed_abs, tag = 'smem constant byte address 0x4 - core index']
  #allocation1 [shape = 'u32[144,128]{1,0:T(1,128)}', space=vmem, size = 0x12000, scoped, tag = 'internal scratch']
  %s0 = inlined_call_operand.vmem [shape: f32[256,16], index: 0, kind: input, shape index: {}]
  %s1 = inlined_call_operand.vmem [shape: f32[16,160], index: 1, kind: input, shape index: {}]
  %s2 = inlined_call_operand.vmem [shape: f32[1,160], index: 2, kind: input, shape index: {}]
  %s3 = inlined_call_operand.vmem [shape: f32[160,32], index: 3, kind: input, shape index: {}]
  %s4 = inlined_call_operand.vmem [shape: f32[1,32], index: 4, kind: input, shape index: {}]
  %s5 = inlined_call_operand.vmem [shape: f32[256,32], index: 5, kind: output, shape index: {}]
  %s6 = sld [smem:[#allocation0]]
  $region53: #{tpu_custom_call.1} parent=0
    _
  %s8 = ssub.s32 1, %s6
  %s9 = scalar_select 0, %s8, %s6
  loop: start=0, step=1, limit=6
  $region2: #{tpu_custom_call.1} parent=0 // loop_pre_header
    _
  $region3: #{tpu_custom_call.1} parent=0 // loop_header
    %s11 = sphi 0, %s15
    %p12 = scmp.ge.s32.totalorder %s11, 6
    %s21 = sphi 0, %s23
    %s24 = sphi 0, %s21
    %s25 = sphi 0, %s24
    %s41 = sphi 0, %s25
    %s45 = sphi 0, %s45
    %s47 = sphi 0, %s45
    %s48 = sphi 0, %s47
    %s62 = sphi 0, %s48
    %s66 = sphi 0, %s66
    %s68 = sphi 0, %s66
    %s69 = sphi 0, %s68
    %s83 = sphi 0, %s69
    %s87 = sphi 0, %s87
    %s89 = sphi 0, %s87
    %s90 = sphi 0, %s89
    %s104 = sphi 0, %s90
    %s108 = sphi 0, %s108
    %s110 = sphi 0, %s108
    %s111 = sphi 0, %s110
    %s125 = sphi 0, %s111
    %s131 = sphi 0, %s133
    %s134 = sphi 0, %s131
    %s135 = sphi 0, %s134
    %s151 = sphi 0, %s135
  $region4: #{tpu_custom_call.1} parent=0 // loop_header_branch
    %14 = sbr.rel (%p12) target = $region8
  $region5: #{tpu_custom_call.1} parent=0 // loop_body
    %s16 = ssub.s32 %s11, 1
    %s17 = ssub.s32 %s11, 2
    %s18 = sadd.s32 %s11, 1
    %s19 = ssub.s32 %s11, %s18
    %p20 = scmp.eq.s32.totalorder %s19, 0
    %s22 = sadd.s32 %s21, 1
    %s23 = scalar_select %p20, %s21, %s22
    %p26 = pneg %p20
    %p27 = scmp.eq.s32.totalorder %s11, 3
    %p28 = por %p26, %p27
    %p29 = scmp.ne.s32.totalorder %s21, %s24
    %p30 = scmp.eq.s32.totalorder %s11, 0
    %p31 = por %p29, %p30
    %p32 = scmp.ne.s32.totalorder %s21, %s24
    %p33 = scmp.eq.s32.totalorder %s16, 3
    %p34 = por %p32, %p33
    %p35 = scmp.ne.s32.totalorder %s24, %s25
    %p36 = scmp.eq.s32.totalorder %s16, 0
    %p37 = por %p35, %p36
    %p38 = scmp.ne.s32.totalorder %s24, %s25
    %p39 = scmp.eq.s32.totalorder %s17, 3
    %p40 = por %p38, %p39
    %p42 = scmp.ne.s32.totalorder %s25, %s41
    %p43 = scmp.eq.s32.totalorder %s17, 0
    %p44 = por %p42, %p43
    %s46 = sadd.s32 %s45, 1
    %p49 = scmp.eq.s32.totalorder %s11, 3
    %p50 = scmp.ne.s32.totalorder %s45, %s47
    %p51 = scmp.eq.s32.totalorder %s11, 0
    %p52 = por %p50, %p51
    %p53 = scmp.ne.s32.totalorder %s45, %s47
    %p54 = scmp.eq.s32.totalorder %s16, 3
    %p55 = por %p53, %p54
    %p56 = scmp.ne.s32.totalorder %s47, %s48
    %p57 = scmp.eq.s32.totalorder %s16, 0
    %p58 = por %p56, %p57
    %p59 = scmp.ne.s32.totalorder %s47, %s48
    %p60 = scmp.eq.s32.totalorder %s17, 3
    %p61 = por %p59, %p60
    %p63 = scmp.ne.s32.totalorder %s48, %s62
    %p64 = scmp.eq.s32.totalorder %s17, 0
    %p65 = por %p63, %p64
    %s67 = sadd.s32 %s66, 1
    %p70 = scmp.eq.s32.totalorder %s11, 3
    %p71 = scmp.ne.s32.totalorder %s66, %s68
    %p72 = scmp.eq.s32.totalorder %s11, 0
    %p73 = por %p71, %p72
    %p74 = scmp.ne.s32.totalorder %s66, %s68
    %p75 = scmp.eq.s32.totalorder %s16, 3
    %p76 = por %p74, %p75
    %p77 = scmp.ne.s32.totalorder %s68, %s69
    %p78 = scmp.eq.s32.totalorder %s16, 0
    %p79 = por %p77, %p78
    %p80 = scmp.ne.s32.totalorder %s68, %s69
    %p81 = scmp.eq.s32.totalorder %s17, 3
    %p82 = por %p80, %p81
    %p84 = scmp.ne.s32.totalorder %s69, %s83
    %p85 = scmp.eq.s32.totalorder %s17, 0
    %p86 = por %p84, %p85
    %s88 = sadd.s32 %s87, 1
    %p91 = scmp.eq.s32.totalorder %s11, 3
    %p92 = scmp.ne.s32.totalorder %s87, %s89
    %p93 = scmp.eq.s32.totalorder %s11, 0
    %p94 = por %p92, %p93
    %p95 = scmp.ne.s32.totalorder %s87, %s89
    %p96 = scmp.eq.s32.totalorder %s16, 3
    %p97 = por %p95, %p96
    %p98 = scmp.ne.s32.totalorder %s89, %s90
    %p99 = scmp.eq.s32.totalorder %s16, 0
    %p100 = por %p98, %p99
    %p101 = scmp.ne.s32.totalorder %s89, %s90
    %p102 = scmp.eq.s32.totalorder %s17, 3
    %p103 = por %p101, %p102
    %p105 = scmp.ne.s32.totalorder %s90, %s104
    %p106 = scmp.eq.s32.totalorder %s17, 0
    %p107 = por %p105, %p106
    %s109 = sadd.s32 %s108, 1
    %p112 = scmp.eq.s32.totalorder %s11, 3
    %p113 = scmp.ne.s32.totalorder %s108, %s110
    %p114 = scmp.eq.s32.totalorder %s11, 0
    %p115 = por %p113, %p114
    %p116 = scmp.ne.s32.totalorder %s108, %s110
    %p117 = scmp.eq.s32.totalorder %s16, 3
    %p118 = por %p116, %p117
    %p119 = scmp.ne.s32.totalorder %s110, %s111
    %p120 = scmp.eq.s32.totalorder %s16, 0
    %p121 = por %p119, %p120
    %p122 = scmp.ne.s32.totalorder %s110, %s111
    %p123 = scmp.eq.s32.totalorder %s17, 3
    %p124 = por %p122, %p123
    %p126 = scmp.ne.s32.totalorder %s111, %s125
    %p127 = scmp.eq.s32.totalorder %s17, 0
    %p128 = por %p126, %p127
    %s129 = ssub.s32 %s11, %s18
    %p130 = scmp.eq.s32.totalorder %s129, 0
    %s132 = sadd.s32 %s131, 1
    %s133 = scalar_select %p130, %s131, %s132
    %p136 = pneg %p130
    %p137 = scmp.eq.s32.totalorder %s11, 3
    %p138 = por %p136, %p137
    %p139 = scmp.ne.s32.totalorder %s131, %s134
    %p140 = scmp.eq.s32.totalorder %s11, 0
    %p141 = por %p139, %p140
    %p142 = scmp.ne.s32.totalorder %s131, %s134
    %p143 = scmp.eq.s32.totalorder %s16, 3
    %p144 = por %p142, %p143
    %p145 = scmp.ne.s32.totalorder %s134, %s135
    %p146 = scmp.eq.s32.totalorder %s16, 0
    %p147 = por %p145, %p146
    %p148 = scmp.ne.s32.totalorder %s134, %s135
    %p149 = scmp.eq.s32.totalorder %s17, 3
    %p150 = por %p148, %p149
    %p152 = scmp.ne.s32.totalorder %s135, %s151
    %p153 = scmp.eq.s32.totalorder %s17, 0
    %p154 = por %p152, %p153
    %p155 = scmp.le.s32.totalorder 1, %s11
    %p156 = scmp.lt.s32.totalorder %s11, 5
    %p157 = pnand %p155, %p156
    %p158 = pneg %p157
    // Predicated region
    $region9: #{tpu_custom_call.1} parent=5 // pred_check
      _
    $region10: #{tpu_custom_call.1} parent=5 // pred_check_branch
      %160 = sbr.rel (%p157) target = $region12
    $region11: #{tpu_custom_call.1} parent=5 // pred_region
      %s161 = ssub.s32 %s11, 1
      // Predicated region
      $region13: #{tpu_custom_call.1} parent=11 // pred_check
        %p162 = pneg %p58
      $region14: #{tpu_custom_call.1} parent=11 // pred_check_branch
        %164 = sbr.rel (%p162) target = $region16
      $region15: #{tpu_custom_call.1} parent=11 // pred_region
        _
      $region16: #{tpu_custom_call.1} parent=11 // pred_fallthru
        _
      // Predicated region
      $region17: #{tpu_custom_call.1} parent=11 // pred_check
        %p165 = pneg %p79
      $region18: #{tpu_custom_call.1} parent=11 // pred_check_branch
        %167 = sbr.rel (%p165) target = $region20
      $region19: #{tpu_custom_call.1} parent=11 // pred_region
        _
      $region20: #{tpu_custom_call.1} parent=11 // pred_fallthru
        _
      // Predicated region
      $region21: #{tpu_custom_call.1} parent=11 // pred_check
        %p168 = pneg %p100
      $region22: #{tpu_custom_call.1} parent=11 // pred_check_branch
        %170 = sbr.rel (%p168) target = $region24
      $region23: #{tpu_custom_call.1} parent=11 // pred_region
        _
      $region24: #{tpu_custom_call.1} parent=11 // pred_fallthru
        _
      // Predicated region
      $region25: #{tpu_custom_call.1} parent=11 // pred_check
        %p171 = pneg %p121
      $region26: #{tpu_custom_call.1} parent=11 // pred_check_branch
        %173 = sbr.rel (%p171) target = $region28
      $region27: #{tpu_custom_call.1} parent=11 // pred_region
        _
      $region28: #{tpu_custom_call.1} parent=11 // pred_fallthru
        _
    $region12: #{tpu_custom_call.1} parent=5 // pred_fallthru
      _
    %p174 = scmp.lt.s32.totalorder %s11, 4
    // Predicated region
    $region29: #{tpu_custom_call.1} parent=5 // pred_check
      %p175 = pneg %p174
    $region30: #{tpu_custom_call.1} parent=5 // pred_check_branch
      %177 = sbr.rel (%p175) target = $region32
    $region31: #{tpu_custom_call.1} parent=5 // pred_region
      // Predicated region
      $region33: #{tpu_custom_call.1} parent=31 // pred_check
        %p178 = pneg %p31
      $region34: #{tpu_custom_call.1} parent=31 // pred_check_branch
        %180 = sbr.rel (%p178) target = $region36
      $region35: #{tpu_custom_call.1} parent=31 // pred_region
        %s181 = smul.u32 8, %s11
        %p182 = scmp.lt.s32.totalorder %s181, 31
        %s183 = scalar_select %p182, %s181, 31
        %s184 = smul.addr %s183, 8
        %s185 = scalar_lea.vmem %s0, %s184
        %s186 = smul.u32 8, %s11
      $region36: #{tpu_custom_call.1} parent=31 // pred_fallthru
        _
    $region32: #{tpu_custom_call.1} parent=5 // pred_fallthru
      _
    %p187 = scmp.le.s32.totalorder 1, %s11
    %p188 = scmp.lt.s32.totalorder %s11, 5
    %p189 = pnand %p187, %p188
    %p190 = pneg %p189
    // Predicated region
    $region37: #{tpu_custom_call.1} parent=5 // pred_check
      _
    $region38: #{tpu_custom_call.1} parent=5 // pred_check_branch
      %192 = sbr.rel (%p189) target = $region40
    $region39: #{tpu_custom_call.1} parent=5 // pred_region
      %s193 = ssub.s32 %s11, 1
      %s194 = smul.u32 8, %s16
      %p195 = scmp.lt.s32.totalorder %s194, 31
      %s196 = scalar_select %p195, %s194, 31
      %s197 = smul.addr %s196, 8
      %s198 = scalar_lea.vmem %s0, %s197
      %p199 = pneg %p37
      %p200 = pneg %p34
      %p201 = pneg %p58
      %p202 = pneg %p55
      %p203 = pneg %p79
      %p204 = pneg %p76
      %p205 = pneg %p100
      %p206 = pneg %p97
      %p207 = pneg %p121
      %p208 = pneg %p118
      %p209 = pneg %p147
      %p210 = pneg %p144
      %s211 = smul.u32 8, %s16
      %p212 = scmp.lt.s32.totalorder %s211, 31
      %s213 = scalar_select %p212, %s211, 31
      %s214 = smul.addr %s213, 8
      %s215 = scalar_lea.vmem %s5, %s214
      %s216 = smul.u32 8, %s16
      %p217 = scmp.lt.s32.totalorder %s216, 31
      %s218 = scalar_select %p217, %s216, 31
      %s219 = smul.addr %s218, 8
      %s220 = scalar_lea.vmem %s0, %s219
      %s221 = smul.u32 8, %s16
      %s222 = smul.u32 8, %s16
      %p223 = scmp.lt.s32.totalorder %s222, 31
      %s224 = scalar_select %p223, %s222, 31
      %s225 = smul.addr %s224, 8
      %s226 = scalar_lea.vmem %s5, %s225
      %s227 = smul.u32 8, %s16
      %v228 = vld [vmem:[%s220] sm:$0xff]
      %v229 = vld [vmem:[%s220 + $0x8] sm:$0xff]
      %v230 = vld [vmem:[%s220 + $0x10] sm:$0xff]
      %v231 = vld [vmem:[%s220 + $0x18] sm:$0xff]
      %v232 = vld [vmem:[%s220 + $0x20] sm:$0xff]
      %v233 = vld [vmem:[%s220 + $0x28] sm:$0xff]
      %v234 = vld [vmem:[%s220 + $0x30] sm:$0xff]
      %v235 = vld [vmem:[%s220 + $0x38] sm:$0xff]
      %v236 = vld [vmem:[%s1] sm:$0xff]
      %v237 = vld [vmem:[%s1 + $0x8] sm:$0xff]
      %v238 = vld [vmem:[%s1 + $0x10] sm:$0xff]
      %v239 = vld [vmem:[%s1 + $0x18] sm:$0xff]
      %v240 = vld [vmem:[%s2] sm:$0x3]
      %v242 = vlaneseq
      %v243 = vshrl.u32 %v242, 7
      %v244 = vsub.s32 0, %v243
      %v245 = vrot.slane %v240, %v244
      %v246 = vlaneseq
      %v247 = vshrl.u32 %v246, 7
      %v248 = vsub.s32 1, %v247
      %v249 = vrot.slane %v240, %v248
      %vm252 = vcmask 130048
      %v254 = vsel %vm252, %v228, 0
      %v257 = vsel %vm252, %v229, 0
      %v260 = vsel %vm252, %v230, 0
      %v263 = vsel %vm252, %v231, 0
      %v266 = vsel %vm252, %v232, 0
      %v269 = vsel %vm252, %v233, 0
      %v272 = vsel %vm252, %v234, 0
      %v275 = vsel %vm252, %v235, 0
      %277 = vmatprep.subr.mxu0 0.0
      %278 = vmatpush1.msra.mxu0 0.0
      %279 = vmatprep.subr.mxu0 0.0
      %280 = vmatpush1.msra.mxu0 0.0
      %281 = vmatprep.subr.mxu0 0.0
      %282 = vmatpush1.msra.mxu0 0.0
      %283 = vmatprep.subr.mxu0 0.0
      %284 = vmatpush1.msra.mxu0 0.0
      %285 = vmatprep.subr.mxu0 0.0
      %286 = vmatpush1.msra.mxu0 0.0
      %287 = vmatprep.subr.mxu0 0.0
      %288 = vmatpush1.msra.mxu0 0.0
      %289 = vmatprep.subr.mxu0 0.0
      %290 = vmatpush1.msra.mxu0 0.0
      %291 = vmatprep.subr.mxu0 0.0
      %292 = vmatpush1.msra.mxu0 0.0
      %293 = vmatprep.subr.mxu0 0.0
      %294 = vmatpush1.msra.mxu0 0.0
      %295 = vmatprep.subr.mxu0 0.0
      %296 = vmatpush1.msra.mxu0 0.0
      %297 = vmatprep.subr.mxu0 0.0
      %298 = vmatpush1.msra.mxu0 0.0
      %299 = vmatprep.subr.mxu0 0.0
      %300 = vmatpush1.msra.mxu0 0.0
      %301 = vmatprep.subr.mxu0 0.0
      %302 = vmatpush1.msra.mxu0 0.0
      %303 = vmatprep.subr.mxu0 0.0
      %304 = vmatpush1.msra.mxu0 0.0
      %305 = vmatprep.subr.mxu0 %v239
      %306 = vmatpush1.msra.mxu0 %v238
      %307 = vmatprep.subr.mxu0 %v237
      %308 = vmatpush1.msra.mxu0 %v236
      %309 = vmatprep.subr.mxu0 0.0
      %310 = vmatpush2.msra.mxu0 0.0
      %311 = vmatprep.subr.mxu0 0.0
      %312 = vmatpush2.msra.mxu0 0.0
      %313 = vmatprep.subr.mxu0 0.0
      %314 = vmatpush2.msra.mxu0 0.0
      %315 = vmatprep.subr.mxu0 0.0
      %316 = vmatpush2.msra.mxu0 0.0
      %317 = vmatprep.subr.mxu0 0.0
      %318 = vmatpush2.msra.mxu0 0.0
      %319 = vmatprep.subr.mxu0 0.0
      %320 = vmatpush2.msra.mxu0 0.0
      %321 = vmatprep.subr.mxu0 0.0
      %322 = vmatpush2.msra.mxu0 0.0
      %323 = vmatprep.subr.mxu0 0.0
      %324 = vmatpush2.msra.mxu0 0.0
      %325 = vmatprep.subr.mxu0 0.0
      %326 = vmatpush2.msra.mxu0 0.0
      %327 = vmatprep.subr.mxu0 0.0
      %328 = vmatpush2.msra.mxu0 0.0
      %329 = vmatprep.subr.mxu0 0.0
      %330 = vmatpush2.msra.mxu0 0.0
      %331 = vmatprep.subr.mxu0 0.0
      %332 = vmatpush2.msra.mxu0 0.0
      %333 = vmatprep.subr.mxu0 0.0
      %334 = vmatpush2.msra.mxu0 0.0
      %335 = vmatprep.subr.mxu0 0.0
      %336 = vmatpush2.msra.mxu0 0.0
      %337 = vmatprep.subr.mxu0 0.0
      %338 = vmatpush2.msra.mxu0 0.0
      %339 = vmatprep.subr.mxu0 0.0
      %340 = vmatpush2.msra.mxu0 0.0
      %341 = vmatprep.mubr.f32.mxu0 0.0
      %342 = vmatmul.mubr.f32.gmra.mxu0 %v254
      %v343 = vpop.f32.mrf.mxu0
      %v344 = vadd.f32 %v245, %v343
      %v345 = vpop.f32.mrf.mxu0
      %v346 = vadd.f32 %v249, %v345
      %347 = vmatprep.mubr.f32.mxu0 0.0
      %348 = vmatmul.mubr.f32.gmra.mxu0 %v257
      %v349 = vpop.f32.mrf.mxu0
      %v350 = vadd.f32 %v245, %v349
      %v351 = vpop.f32.mrf.mxu0
      %v352 = vadd.f32 %v249, %v351
      %353 = vmatprep.mubr.f32.mxu0 0.0
      %354 = vmatmul.mubr.f32.gmra.mxu0 %v260
      %v355 = vpop.f32.mrf.mxu0
      %v356 = vadd.f32 %v245, %v355
      %v357 = vpop.f32.mrf.mxu0
      %v358 = vadd.f32 %v249, %v357
      %359 = vmatprep.mubr.f32.mxu0 0.0
      %360 = vmatmul.mubr.f32.gmra.mxu0 %v263
      %v361 = vpop.f32.mrf.mxu0
      %v362 = vadd.f32 %v245, %v361
      %v363 = vpop.f32.mrf.mxu0
      %v364 = vadd.f32 %v249, %v363
      %365 = vmatprep.mubr.f32.mxu0 0.0
      %366 = vmatmul.mubr.f32.gmra.mxu0 %v266
      %v367 = vpop.f32.mrf.mxu0
      %v368 = vadd.f32 %v245, %v367
      %v369 = vpop.f32.mrf.mxu0
      %v370 = vadd.f32 %v249, %v369
      %371 = vmatprep.mubr.f32.mxu0 0.0
      %372 = vmatmul.mubr.f32.gmra.mxu0 %v269
      %v373 = vpop.f32.mrf.mxu0
      %v374 = vadd.f32 %v245, %v373
      %v375 = vpop.f32.mrf.mxu0
      %v376 = vadd.f32 %v249, %v375
      %377 = vmatprep.mubr.f32.mxu0 0.0
      %378 = vmatmul.mubr.f32.gmra.mxu0 %v272
      %v379 = vpop.f32.mrf.mxu0
      %v380 = vadd.f32 %v245, %v379
      %v381 = vpop.f32.mrf.mxu0
      %v382 = vadd.f32 %v249, %v381
      %383 = vmatprep.mubr.f32.mxu0 0.0
      %384 = vmatmul.mubr.f32.gmra.mxu0 %v275
      %v385 = vpop.f32.mrf.mxu0
      %v386 = vadd.f32 %v245, %v385
      %v387 = vpop.f32.mrf.mxu0
      %v388 = vadd.f32 %v249, %v387
      %389 = vdwg.mxu0
      %v390 = vxor.u32 %v344, 2147483648
      %v391 = vxor.u32 %v346, 2147483648
      %v392 = vxor.u32 %v350, 2147483648
      %v393 = vxor.u32 %v352, 2147483648
      %v394 = vxor.u32 %v356, 2147483648
      %v395 = vxor.u32 %v358, 2147483648
      %v396 = vxor.u32 %v362, 2147483648
      %v397 = vxor.u32 %v364, 2147483648
      %v398 = vxor.u32 %v368, 2147483648
      %v399 = vxor.u32 %v370, 2147483648
      %v400 = vxor.u32 %v374, 2147483648
      %v401 = vxor.u32 %v376, 2147483648
      %v402 = vxor.u32 %v380, 2147483648
      %v403 = vxor.u32 %v382, 2147483648
      %v404 = vxor.u32 %v386, 2147483648
      %v405 = vxor.u32 %v388, 2147483648
      %v406 = vmul.f32 %v390, 1.442695
      %v407 = vpow.pop %v406
      %v408 = vmul.f32 %v391, 1.442695
      %v409 = vpow.pop %v408
      %v410 = vmul.f32 %v392, 1.442695
      %v411 = vpow.pop %v410
      %v412 = vmul.f32 %v393, 1.442695
      %v413 = vpow.pop %v412
      %v414 = vmul.f32 %v394, 1.442695
      %v415 = vpow.pop %v414
      %v416 = vmul.f32 %v395, 1.442695
      %v417 = vpow.pop %v416
      %v418 = vmul.f32 %v396, 1.442695
      %v419 = vpow.pop %v418
      %v420 = vmul.f32 %v397, 1.442695
      %v421 = vpow.pop %v420
      %v422 = vmul.f32 %v398, 1.442695
      %v423 = vpow.pop %v422
      %v424 = vmul.f32 %v399, 1.442695
      %v425 = vpow.pop %v424
      %v426 = vmul.f32 %v400, 1.442695
      %v427 = vpow.pop %v426
      %v428 = vmul.f32 %v401, 1.442695
      %v429 = vpow.pop %v428
      %v430 = vmul.f32 %v402, 1.442695
      %v431 = vpow.pop %v430
      %v432 = vmul.f32 %v403, 1.442695
      %v433 = vpow.pop %v432
      %v434 = vmul.f32 %v404, 1.442695
      %v435 = vpow.pop %v434
      %v436 = vmul.f32 %v405, 1.442695
      %v437 = vpow.pop %v436
      %v438 = vadd.f32 %v407, 1.0
      %v439 = vadd.f32 %v409, 1.0
      %v440 = vadd.f32 %v411, 1.0
      %v441 = vadd.f32 %v413, 1.0
      %v442 = vadd.f32 %v415, 1.0
      %v443 = vadd.f32 %v417, 1.0
      %v444 = vadd.f32 %v419, 1.0
      %v445 = vadd.f32 %v421, 1.0
      %v446 = vadd.f32 %v423, 1.0
      %v447 = vadd.f32 %v425, 1.0
      %v448 = vadd.f32 %v427, 1.0
      %v449 = vadd.f32 %v429, 1.0
      %v450 = vadd.f32 %v431, 1.0
      %v451 = vadd.f32 %v433, 1.0
      %v452 = vadd.f32 %v435, 1.0
      %v453 = vadd.f32 %v437, 1.0
      %v454 = vrcp.pop %v438
      %v455 = vmul.f32 1.0, %v454
      %v456 = vrcp.pop %v439
      %v457 = vmul.f32 1.0, %v456
      %v458 = vrcp.pop %v440
      %v459 = vmul.f32 1.0, %v458
      %v460 = vrcp.pop %v441
      %v461 = vmul.f32 1.0, %v460
      %v462 = vrcp.pop %v442
      %v463 = vmul.f32 1.0, %v462
      %v464 = vrcp.pop %v443
      %v465 = vmul.f32 1.0, %v464
      %v466 = vrcp.pop %v444
      %v467 = vmul.f32 1.0, %v466
      %v468 = vrcp.pop %v445
      %v469 = vmul.f32 1.0, %v468
      %v470 = vrcp.pop %v446
      %v471 = vmul.f32 1.0, %v470
      %v472 = vrcp.pop %v447
      %v473 = vmul.f32 1.0, %v472
      %v474 = vrcp.pop %v448
      %v475 = vmul.f32 1.0, %v474
      %v476 = vrcp.pop %v449
      %v477 = vmul.f32 1.0, %v476
      %v478 = vrcp.pop %v450
      %v479 = vmul.f32 1.0, %v478
      %v480 = vrcp.pop %v451
      %v481 = vmul.f32 1.0, %v480
      %v482 = vrcp.pop %v452
      %v483 = vmul.f32 1.0, %v482
      %v484 = vrcp.pop %v453
      %v485 = vmul.f32 1.0, %v484
      %v486 = vmul.f32 %v344, %v455
      %v487 = vmul.f32 %v346, %v457
      %v488 = vmul.f32 %v350, %v459
      %v489 = vmul.f32 %v352, %v461
      %v490 = vmul.f32 %v356, %v463
      %v491 = vmul.f32 %v358, %v465
      %v492 = vmul.f32 %v362, %v467
      %v493 = vmul.f32 %v364, %v469
      %v494 = vmul.f32 %v368, %v471
      %v495 = vmul.f32 %v370, %v473
      %v496 = vmul.f32 %v374, %v475
      %v497 = vmul.f32 %v376, %v477
      %v498 = vmul.f32 %v380, %v479
      %v499 = vmul.f32 %v382, %v481
      %v500 = vmul.f32 %v386, %v483
      %v501 = vmul.f32 %v388, %v485
      %v502 = vld [vmem:[%s3] sm:$0xff]
      %v503 = vld [vmem:[%s3 + $0x8] sm:$0xff]
      %v504 = vld [vmem:[%s3 + $0x10] sm:$0xff]
      %v505 = vld [vmem:[%s3 + $0x18] sm:$0xff]
      %v506 = vld [vmem:[%s3 + $0x20] sm:$0xff]
      %v507 = vld [vmem:[%s3 + $0x28] sm:$0xff]
      %v508 = vld [vmem:[%s3 + $0x30] sm:$0xff]
      %v509 = vld [vmem:[%s3 + $0x38] sm:$0xff]
      %v510 = vld [vmem:[%s3 + $0x40] sm:$0xff]
      %v511 = vld [vmem:[%s3 + $0x48] sm:$0xff]
      %v512 = vld [vmem:[%s3 + $0x50] sm:$0xff]
      %v513 = vld [vmem:[%s3 + $0x58] sm:$0xff]
      %v514 = vld [vmem:[%s3 + $0x60] sm:$0xff]
      %v515 = vld [vmem:[%s3 + $0x68] sm:$0xff]
      %v516 = vld [vmem:[%s3 + $0x70] sm:$0xff]
      %v517 = vld [vmem:[%s3 + $0x78] sm:$0xff]
      %v518 = vld [vmem:[%s3 + $0x80] sm:$0xff]
      %v519 = vld [vmem:[%s3 + $0x88] sm:$0xff]
      %v520 = vld [vmem:[%s3 + $0x90] sm:$0xff]
      %v521 = vld [vmem:[%s3 + $0x98] sm:$0xff]
      %v522 = vld [vmem:[%s4] sm:$0x1]
      %v524 = vlaneseq
      %v525 = vshrl.u32 %v524, 7
      %v526 = vsub.s32 0, %v525
      %v527 = vrot.slane %v522, %v526
      %vm529 = vcmask 261120
      %v531 = vsel %vm529, %v487, 0
      %v534 = vsel %vm529, %v489, 0
      %v537 = vsel %vm529, %v491, 0
      %v540 = vsel %vm529, %v493, 0
      %v543 = vsel %vm529, %v495, 0
      %v546 = vsel %vm529, %v497, 0
      %v549 = vsel %vm529, %v499, 0
      %v552 = vsel %vm529, %v501, 0
      %554 = vmatprep.subr.mxu0 0.0
      %555 = vmatpush1.msra.mxu0 %v517
      %556 = vmatprep.subr.mxu0 0.0
      %557 = vmatpush1.msra.mxu0 %v516
      %558 = vmatprep.subr.mxu0 0.0
      %559 = vmatpush1.msra.mxu0 %v515
      %560 = vmatprep.subr.mxu0 0.0
      %561 = vmatpush1.msra.mxu0 %v514
      %562 = vmatprep.subr.mxu0 0.0
      %563 = vmatpush1.msra.mxu0 %v513
      %564 = vmatprep.subr.mxu0 0.0
      %565 = vmatpush1.msra.mxu0 %v512
      %566 = vmatprep.subr.mxu0 0.0
      %567 = vmatpush1.msra.mxu0 %v511
      %568 = vmatprep.subr.mxu0 0.0
      %569 = vmatpush1.msra.mxu0 %v510
      %570 = vmatprep.subr.mxu0 0.0
      %571 = vmatpush1.msra.mxu0 %v509
      %572 = vmatprep.subr.mxu0 0.0
      %573 = vmatpush1.msra.mxu0 %v508
      %574 = vmatprep.subr.mxu0 0.0
      %575 = vmatpush1.msra.mxu0 %v507
      %576 = vmatprep.subr.mxu0 0.0
      %577 = vmatpush1.msra.mxu0 %v506
      %578 = vmatprep.subr.mxu0 0.0
      %579 = vmatpush1.msra.mxu0 %v505
      %580 = vmatprep.subr.mxu0 0.0
      %581 = vmatpush1.msra.mxu0 %v504
      %582 = vmatprep.subr.mxu0 0.0
      %583 = vmatpush1.msra.mxu0 %v503
      %584 = vmatprep.subr.mxu0 0.0
      %585 = vmatpush1.msra.mxu0 %v502
      %586 = vmatprep.subr.mxu0 0.0
      %587 = vmatpush2.msra.mxu0 0.0
      %588 = vmatprep.subr.mxu0 0.0
      %589 = vmatpush2.msra.mxu0 0.0
      %590 = vmatprep.subr.mxu0 0.0
      %591 = vmatpush2.msra.mxu0 0.0
      %592 = vmatprep.subr.mxu0 0.0
      %593 = vmatpush2.msra.mxu0 0.0
      %594 = vmatprep.subr.mxu0 0.0
      %595 = vmatpush2.msra.mxu0 0.0
      %596 = vmatprep.subr.mxu0 0.0
      %597 = vmatpush2.msra.mxu0 0.0
      %598 = vmatprep.subr.mxu0 0.0
      %599 = vmatpush2.msra.mxu0 0.0
      %600 = vmatprep.subr.mxu0 0.0
      %601 = vmatpush2.msra.mxu0 0.0
      %602 = vmatprep.subr.mxu0 0.0
      %603 = vmatpush2.msra.mxu0 0.0
      %604 = vmatprep.subr.mxu0 0.0
      %605 = vmatpush2.msra.mxu0 0.0
      %606 = vmatprep.subr.mxu0 0.0
      %607 = vmatpush2.msra.mxu0 0.0
      %608 = vmatprep.subr.mxu0 0.0
      %609 = vmatpush2.msra.mxu0 0.0
      %610 = vmatprep.subr.mxu0 0.0
      %611 = vmatpush2.msra.mxu0 %v521
      %612 = vmatprep.subr.mxu0 0.0
      %613 = vmatpush2.msra.mxu0 %v520
      %614 = vmatprep.subr.mxu0 0.0
      %615 = vmatpush2.msra.mxu0 %v519
      %616 = vmatprep.subr.mxu0 0.0
      %617 = vmatpush2.msra.mxu0 %v518
      %618 = vmatprep.mubr.f32.mxu0 %v531
      %619 = vmatmul.mubr.f32.gmra.mxu0 %v486
      %v620 = vpop.f32.mrf.mxu0
      %v621 = vadd.f32 %v527, %v620
      %v622 = vpop.f32.mrf.mxu0
      %623 = vmatprep.mubr.f32.mxu0 %v534
      %624 = vmatmul.mubr.f32.gmra.mxu0 %v488
      %v625 = vpop.f32.mrf.mxu0
      %v626 = vadd.f32 %v527, %v625
      %v627 = vpop.f32.mrf.mxu0
      %628 = vmatprep.mubr.f32.mxu0 %v537
      %629 = vmatmul.mubr.f32.gmra.mxu0 %v490
      %v630 = vpop.f32.mrf.mxu0
      %v631 = vadd.f32 %v527, %v630
      %v632 = vpop.f32.mrf.mxu0
      %633 = vmatprep.mubr.f32.mxu0 %v540
      %634 = vmatmul.mubr.f32.gmra.mxu0 %v492
      %v635 = vpop.f32.mrf.mxu0
      %v636 = vadd.f32 %v527, %v635
      %v637 = vpop.f32.mrf.mxu0
      %638 = vmatprep.mubr.f32.mxu0 %v543
      %639 = vmatmul.mubr.f32.gmra.mxu0 %v494
      %v640 = vpop.f32.mrf.mxu0
      %v641 = vadd.f32 %v527, %v640
      %v642 = vpop.f32.mrf.mxu0
      %643 = vmatprep.mubr.f32.mxu0 %v546
      %644 = vmatmul.mubr.f32.gmra.mxu0 %v496
      %v645 = vpop.f32.mrf.mxu0
      %v646 = vadd.f32 %v527, %v645
      %v647 = vpop.f32.mrf.mxu0
      %648 = vmatprep.mubr.f32.mxu0 %v549
      %649 = vmatmul.mubr.f32.gmra.mxu0 %v498
      %v650 = vpop.f32.mrf.mxu0
      %v651 = vadd.f32 %v527, %v650
      %v652 = vpop.f32.mrf.mxu0
      %653 = vmatprep.mubr.f32.mxu0 %v552
      %654 = vmatmul.mubr.f32.gmra.mxu0 %v500
      %v655 = vpop.f32.mrf.mxu0
      %v656 = vadd.f32 %v527, %v655
      %v657 = vpop.f32.mrf.mxu0
      %658 = vdwg.mxu0
      %659 = vst.msk [vmem:[%s226] sm:$0xff] %vm529, %v621
      %660 = vst.msk [vmem:[%s226 + $0x8] sm:$0xff] %vm529, %v626
      %661 = vst.msk [vmem:[%s226 + $0x10] sm:$0xff] %vm529, %v631
      %662 = vst.msk [vmem:[%s226 + $0x18] sm:$0xff] %vm529, %v636
      %663 = vst.msk [vmem:[%s226 + $0x20] sm:$0xff] %vm529, %v641
      %664 = vst.msk [vmem:[%s226 + $0x28] sm:$0xff] %vm529, %v646
      %665 = vst.msk [vmem:[%s226 + $0x30] sm:$0xff] %vm529, %v651
      %666 = vst.msk [vmem:[%s226 + $0x38] sm:$0xff] %vm529, %v656
      %s667 = smul.u32 8, %s16
      %p668 = scmp.lt.s32.totalorder %s667, 31
      %s669 = scalar_select %p668, %s667, 31
      %s670 = smul.addr %s669, 8
      %s671 = scalar_lea.vmem %s5, %s670
      // Predicated region
      $region41: #{tpu_custom_call.1} parent=39 // pred_check
        %p672 = pneg %p144
      $region42: #{tpu_custom_call.1} parent=39 // pred_check_branch
        %674 = sbr.rel (%p672) target = $region44
      $region43: #{tpu_custom_call.1} parent=39 // pred_region
        %s675 = smul.u32 8, %s16
      $region44: #{tpu_custom_call.1} parent=39 // pred_fallthru
        _
    $region40: #{tpu_custom_call.1} parent=5 // pred_fallthru
      _
    %p676 = scmp.le.s32.totalorder 2, %s11
    // Predicated region
    $region45: #{tpu_custom_call.1} parent=5 // pred_check
      %p677 = pneg %p676
    $region46: #{tpu_custom_call.1} parent=5 // pred_check_branch
      %679 = sbr.rel (%p677) target = $region48
    $region47: #{tpu_custom_call.1} parent=5 // pred_region
      %s680 = ssub.s32 %s11, 2
      // Predicated region
      $region49: #{tpu_custom_call.1} parent=47 // pred_check
        %p681 = pneg %p150
      $region50: #{tpu_custom_call.1} parent=47 // pred_check_branch
        %683 = sbr.rel (%p681) target = $region52
      $region51: #{tpu_custom_call.1} parent=47 // pred_region
        %s684 = smul.u32 8, %s17
        %p685 = scmp.lt.s32.totalorder %s684, 31
        %s686 = scalar_select %p685, %s684, 31
        %s687 = smul.addr %s686, 8
        %s688 = scalar_lea.vmem %s5, %s687
      $region52: #{tpu_custom_call.1} parent=47 // pred_fallthru
        _
    $region48: #{tpu_custom_call.1} parent=5 // pred_fallthru
      _
  $region6: #{tpu_custom_call.1} parent=0 // loop_footer
    %s15 = sadd.s32 1, %s11
  $region7: #{tpu_custom_call.1} parent=0 // loop_footer_branch
    %10 = sbr.rel target = $region3
  $region8: #{tpu_custom_call.1} parent=0 // loop_exit
    _

</llo_original>
